<compile_context>
chip_gen: v7x
topology: tpu7x:2x2x1
jax: 0.10.0
libtpu: 0.0.40
codegen_flags: <defaults>
</compile_context>

<pallas_src>
import functools

import jax
import jax.numpy as jnp
from jax.experimental import pallas as pl
from jax.experimental.pallas import tpu as pltpu

_LANE = 128
_MAX_BLOCK_COLS = 2048            # lane-dense slab width (multiple of 128)
_TARGET_BLOCK_BYTES = 4 << 20     # ~4 MiB/block -> 16 MiB double-buffered working set
_VMEM_LIMIT_BYTES = 32 << 20      # comfortably admits the working set on v5e/v6e/v7x


def _round_up(a, b):
    return -(-a // b) * b


def _cdiv(a, b):
    return -(-a // b)


def _quant_apply_kernel(params_ref, x_ref, o_ref, *, qmin, qmax):
    """Elementwise fake-quant apply.

    params_ref (SMEM f32[3]) = [scale, inv_scale, pre_add], pre_add = qmin*scale - zp_eff.
    out = round(clamp((x + pre_add) * inv_scale, qmin, qmax)) * scale - pre_add
    """
    scale = params_ref[0]
    inv_scale = params_ref[1]
    pre = params_ref[2]
    x = x_ref[...].astype(jnp.float32)        # f32 math: required on v5e, free under mem bound
    q = jnp.round(jnp.clip((x + pre) * inv_scale, qmin, qmax))
    o_ref[...] = (q * scale - pre).astype(o_ref.dtype)


def quant_th_update(x, running_range, running_zero_point, *, num_bits=8, signed=False,
                    inplace=False):
    """Forward pass of QuantThUpdate (quant_zp=True, dequantize=True, stochastic=False)."""
    qmin = -(2.0 ** (num_bits - 1)) if signed else 0.0
    qmax = qmin + 2.0 ** num_bits - 1.0

    # ---- scalar qparam math (shape_measure=(1,)) done once, outside the kernel ----
    rr = jnp.clip(running_range.astype(jnp.float32).reshape(()), 1e-6, 1e5)   # .clamp(1e-6, 1e5)
    zp_param = running_zero_point.astype(jnp.float32).reshape(())
    scale = rr / (qmax - qmin)
    zp_round = jnp.round(qmin - zp_param / scale)                 # Round().apply(...)
    zp_eff = (qmin - jnp.clip(zp_round, qmin, qmax)) * scale      # quant_zp=True branch
    pre_add = qmin * scale - zp_eff                               # output.add_(qmin*scale - zp)
    params = jnp.stack([scale, 1.0 / scale, pre_add]).astype(jnp.float32)     # f32[3] -> SMEM

    # ---- re-slab to lane-dense 2D: (rows, cols), cols a multiple of 128 ----
    orig_shape = x.shape
    total = int(x.size)
    itemsize = int(jnp.dtype(x.dtype).itemsize)
    cols = min(_MAX_BLOCK_COLS, _round_up(max(total, 1), _LANE))
    rows = _cdiv(max(total, 1), cols)
    padded = rows * cols
    x_flat = x.reshape(-1)
    if padded != total:
        x_flat = jnp.pad(x_flat, (0, padded - total))
    x2d = x_flat.reshape(rows, cols)

    # ---- block rows: dtype-aware sublane alignment, ~4 MiB per block ----
    sub = max(8, 8 * (4 // itemsize))                    # 8 (f32) / 16 (bf16) / 32 (int8/fp8)
    target_rows = max(sub, (_TARGET_BLOCK_BYTES // (cols * itemsize)) // sub * sub)
    block_rows = min(target_rows, _round_up(rows, sub))
    # v7x megacore: make sure both TensorCores get at least one block when possible.
    if rows > sub and _cdiv(rows, block_rows) < 2:
        block_rows = max(sub, _round_up(_cdiv(rows, 2), sub))
    grid = (_cdiv(rows, block_rows),)                    # cdiv grid; Pallas masks remainders

    kernel = functools.partial(_quant_apply_kernel, qmin=qmin, qmax=qmax)
    out2d = pl.pallas_call(
        kernel,
        out_shape=jax.ShapeDtypeStruct((rows, cols), x.dtype),
        grid=grid,
        in_specs=[
            pl.BlockSpec(memory_space=pltpu.MemorySpace.SMEM),   # [scale, inv_scale, pre_add]
            pl.BlockSpec((block_rows, cols), lambda i: (i, 0)),
        ],
        out_specs=pl.BlockSpec((block_rows, cols), lambda i: (i, 0)),
        compiler_params=pltpu.CompilerParams(
            dimension_semantics=("parallel",),
            vmem_limit_bytes=_VMEM_LIMIT_BYTES,
        ),
        cost_estimate=pl.CostEstimate(
            flops=7 * total, transcendentals=0, bytes_accessed=2 * itemsize * total),
        input_output_aliases=({1: 0} if inplace else {}),
    )(params, x2d)

    out_flat = out2d.reshape(-1)
    if padded != total:
        out_flat = out_flat[:total]
    return out_flat.reshape(orig_shape)


def _quant_th_update_ref(x, running_range, running_zero_point, num_bits=8, signed=False):
    """Pure-JAX reference, literal transcription of quantize_with_grad (PyTorch)."""
    qmin = -(2.0 ** (num_bits - 1)) if signed else 0.0
    qmax = qmin + 2.0 ** num_bits - 1.0
    rr = jnp.clip(running_range.astype(jnp.float32).reshape(()), 1e-6, 1e5)
    zp = running_zero_point.astype(jnp.float32).reshape(())
    scale = rr / (qmax - qmin)
    zp_round = jnp.round(qmin - zp / scale)
    zp_eff = (qmin - jnp.clip(zp_round, qmin, qmax)) * scale
    xf = x.astype(jnp.float32)
    out = (xf + (qmin * scale - zp_eff)) / scale             # output.add_(...).div_(scale)
    out = jnp.round(jnp.clip(out, qmin, qmax))               # Round(clamp)
    out = out * scale + (zp_eff - qmin * scale)              # dequantize
    return out.astype(x.dtype)


if __name__ == "__main__":
    key = jax.random.PRNGKey(0)
    k1, k2, k3, k4, k5 = jax.random.split(key, 5)

    # 1) NCHW activation, module-default parameters (nn.Parameter(torch.ones(1))).
    x = jax.random.normal(k1, (2, 4, 16, 16), dtype=jnp.float32)
    rr = jnp.ones((1,), dtype=jnp.float32)
    zp = jnp.ones((1,), dtype=jnp.float32)
    out = jax.block_until_ready(quant_th_update(x, rr, zp))
    ref = jax.block_until_ready(_quant_th_update_ref(x, rr, zp))
    assert out.shape == x.shape and out.dtype == x.dtype
    assert jnp.allclose(out, ref, atol=1e-5, rtol=1e-5), "mismatch (default params)"

    # 2) Non-trivial "learned" parameters to exercise the quant_zp rounding/clamp path.
    rr2 = jnp.asarray([4.0], dtype=jnp.float32)
    zp2 = jnp.asarray([-2.0], dtype=jnp.float32)
    x2 = 2.0 * jax.random.normal(k2, (2, 4, 16, 16), dtype=jnp.float32) - 1.0
    out2 = jax.block_until_ready(quant_th_update(x2, rr2, zp2))
    ref2 = jax.block_until_ready(_quant_th_update_ref(x2, rr2, zp2))
    assert jnp.allclose(out2, ref2, atol=1e-5, rtol=1e-5), "mismatch (custom params)"

    # 3) Awkward shape (total not a multiple of 128) -> exercises the pad/slab path.
    x3 = jax.random.normal(k3, (3, 5, 7), dtype=jnp.float32)
    out3 = jax.block_until_ready(quant_th_update(x3, rr2, zp2))
    ref3 = jax.block_until_ready(_quant_th_update_ref(x3, rr2, zp2))
    assert out3.shape == x3.shape
    assert jnp.allclose(out3, ref3, atol=1e-5, rtol=1e-5), "mismatch (awkward shape)"

    # 4) signed=True path (qmin = -128): kernel formula must match the reference.
    x4 = jax.random.normal(k4, (2, 4, 8, 8), dtype=jnp.float32) * 3.0
    out4 = jax.block_until_ready(quant_th_update(x4, rr2, zp2, signed=True))
    ref4 = jax.block_until_ready(_quant_th_update_ref(x4, rr2, zp2, signed=True))
    assert jnp.allclose(out4, ref4, atol=1e-5, rtol=1e-5), "mismatch (signed)"

    # 5) bf16 input -> exercises dtype-aware sublane alignment (16) and f32 in-kernel math.
    x5 = jax.random.normal(k5, (4, 256), dtype=jnp.float32).astype(jnp.bfloat16)
    out5 = jax.block_until_ready(quant_th_update(x5, rr, zp))
    ref5 = jax.block_until_ready(_quant_th_update_ref(x5, rr, zp))
    assert out5.dtype == jnp.bfloat16
    assert jnp.allclose(out5.astype(jnp.float32), ref5.astype(jnp.float32),
                        atol=2e-2, rtol=0), "mismatch (bf16)"

    print("KERNEL_OK")
</pallas_src>

<mosaic_0001>
module attributes {stable_mosaic.version = 11 : i64} {
  func.func @_quant_apply_kernel(%arg0: i32, %arg1: memref<3xf32, #tpu.memory_space<smem>>, %arg2: memref<8x2048xf32, #tpu.memory_space<vmem>>, %arg3: memref<8x2048xf32, #tpu.memory_space<vmem>>) attributes {dimension_semantics = [#tpu.dimension_semantics<parallel>], iteration_bounds = array<i64: 1>, scalar_prefetch = 0 : i64, scratch_operands = 0 : i64, tpu.core_type = #tpu.core_type<tc>, window_params = [{transform_indices = @transform_0, window_bounds = array<i64: 3>}, {transform_indices = @transform_1, window_bounds = array<i64: 8, 2048>}, {transform_indices = @transform_2, window_bounds = array<i64: 8, 2048>}]} {
    %c0 = arith.constant 0 : index
    %0 = memref.load %arg1[%c0] : memref<3xf32, #tpu.memory_space<smem>>
    %c1 = arith.constant 1 : index
    %1 = memref.load %arg1[%c1] : memref<3xf32, #tpu.memory_space<smem>>
    %c2 = arith.constant 2 : index
    %2 = memref.load %arg1[%c2] : memref<3xf32, #tpu.memory_space<smem>>
    %c0_0 = arith.constant 0 : index
    %c0_1 = arith.constant 0 : index
    %3 = vector.load %arg2[%c0_0, %c0_1] : memref<8x2048xf32, #tpu.memory_space<vmem>>, vector<8x2048xf32>
    %4 = vector.broadcast %2 : f32 to vector<8x2048xf32>
    %5 = arith.addf %3, %4 : vector<8x2048xf32>
    %6 = vector.broadcast %1 : f32 to vector<8x2048xf32>
    %7 = arith.mulf %5, %6 : vector<8x2048xf32>
    %cst = arith.constant 0.000000e+00 : f32
    %cst_2 = arith.constant 2.550000e+02 : f32
    %8 = vector.broadcast %cst : f32 to vector<8x2048xf32>
    %9 = arith.maximumf %8, %7 : vector<8x2048xf32>
    %10 = vector.broadcast %cst_2 : f32 to vector<8x2048xf32>
    %11 = arith.minimumf %10, %9 : vector<8x2048xf32>
    %12 = math.roundeven %11 : vector<8x2048xf32>
    %13 = vector.broadcast %0 : f32 to vector<8x2048xf32>
    %14 = arith.mulf %12, %13 : vector<8x2048xf32>
    %15 = vector.broadcast %2 : f32 to vector<8x2048xf32>
    %16 = arith.subf %14, %15 : vector<8x2048xf32>
    %c0_3 = arith.constant 0 : index
    %c0_4 = arith.constant 0 : index
    %17 = vector.load %arg3[%c0_3, %c0_4] : memref<8x2048xf32, #tpu.memory_space<vmem>>, vector<8x2048xf32>
    tpu.vector_store %arg3[%c0_3, %c0_4], %16 {strides = array<i32>} : memref<8x2048xf32, #tpu.memory_space<vmem>>, vector<8x2048xf32>,
    return
  }
  func.func @transform_0(%arg0: i32) -> i32 {
    %c0_i32 = arith.constant 0 : i32
    %c0_i32_0 = arith.constant 0 : i32
    return %c0_i32 : i32
  }
  func.func @transform_1(%arg0: i32) -> (i32, i32) {
    %c0_i32 = arith.constant 0 : i32
    %c0_i32_0 = arith.constant 0 : i32
    return %arg0, %c0_i32 : i32, i32
  }
  func.func @transform_2(%arg0: i32) -> (i32, i32) {
    %c0_i32 = arith.constant 0 : i32
    %c0_i32_0 = arith.constant 0 : i32
    return %arg0, %c0_i32 : i32, i32
  }
}

</mosaic_0001>

<llo_original>
// kernel: tpu_custom_call.1
$region0: #{tpu_custom_call.1}
  #allocation0 [shape = 'u32[]', space=smem, size = 0x4, offset = 0x4, fixed_abs, tag = 'smem constant byte address 0x4 - core index']
  #allocation1 [shape = 'u32[144,128]{1,0:T(1,128)}', space=vmem, size = 0x12000, scoped, tag = 'internal scratch']
  %s0 = inlined_call_operand.hbm [shape: f32[3], index: 0, kind: input, shape index: {}]
  %s1 = inlined_call_operand.hbm [shape: f32[1,2048], index: 1, kind: input, shape index: {}]
  %s2 = inlined_call_operand.hbm [shape: f32[1,2048], index: 2, kind: output, shape index: {}]
  %s3 = sld [smem:[#allocation0]]
  $region26: #{tpu_custom_call.1} parent=0
    _
  %s5 = ssub.s32 1, %s3
  %s6 = scalar_select 0, %s5, %s3
  $region1: #{tpu_custom_call.1} parent=0
    #allocation2 [shape = 'u8[512]{0}', space=smem, size = 0x200, scoped, tag = 'input window, operand 0, single buffered']
    #allocation3 [shape = 's32[1]{0}', space=sflag, size = 0x4, scoped, tag = 'scoped memory for tpu_custom_call.1']
    #allocation4 [shape = 's32[1]{0}', space=sflag, size = 0x4, scoped, tag = 'scoped memory for tpu_custom_call.1']
    #allocation5 [shape = 's32[1]{0}', space=sflag, size = 0x4, scoped, tag = 'scoped memory for tpu_custom_call.1']
    #allocation6 [shape = 'u8[65536]{0}', space=vmem, size = 0x10000, scoped, tag = 'input window, operand 1, single buffered']
    #allocation7 [shape = 'u8[65536]{0}', space=vmem, size = 0x10000, scoped, tag = 'output window, operand 0, single buffered']
    %7 = vsyncpa [#allocation5], 0
    %8 = vsyncpa [#allocation3], 0
    %9 = vsyncpa [#allocation4], 0
    // Predicated region
    $region2: #{tpu_custom_call.1} parent=1 // pred_check
      _
    $region3: #{tpu_custom_call.1} parent=1 // pred_check_branch
      %11 = sbr.rel (0) target = $region5
    $region4: #{tpu_custom_call.1} parent=1 // pred_region
      %s13 = ssub.s32 16, 16
      %14 = vsyncadd [#allocation5], %s13
      %17 = dma.hbm_to_smem %s0, 16, [#allocation2], [#allocation5]
    $region5: #{tpu_custom_call.1} parent=1 // pred_fallthru
      _
    // Predicated region
    $region6: #{tpu_custom_call.1} parent=1 // pred_check
      _
    $region7: #{tpu_custom_call.1} parent=1 // pred_check_branch
      %19 = sbr.rel (0) target = $region9
    $region8: #{tpu_custom_call.1} parent=1 // pred_region
      %s21 = ssub.s32 2048, 256
      %22 = vsyncadd [#allocation3], %s21
      %s23 = sshll.u32 [#allocation6], 4
      %s24 = int_to_ptr.vmem [resolvable:$true] %s23
      %29 = dma.hbm_to_vmem [thread:$0]  %s1, 256, %s24, [#allocation3], 256, 256, 16
    $region9: #{tpu_custom_call.1} parent=1 // pred_fallthru
      _
    // Predicated region
    $region10: #{tpu_custom_call.1} parent=1 // pred_check
      _
    $region11: #{tpu_custom_call.1} parent=1 // pred_check_branch
      %31 = sbr.rel (0) target = $region13
    $region12: #{tpu_custom_call.1} parent=1 // pred_region
      %32 = dma.done [#allocation5], 16
    $region13: #{tpu_custom_call.1} parent=1 // pred_fallthru
      _
    // Predicated region
    $region14: #{tpu_custom_call.1} parent=1 // pred_check
      _
    $region15: #{tpu_custom_call.1} parent=1 // pred_check_branch
      %34 = sbr.rel (0) target = $region17
    $region16: #{tpu_custom_call.1} parent=1 // pred_region
      %35 = dma.done [#allocation3], 2048
    $region17: #{tpu_custom_call.1} parent=1 // pred_fallthru
      _
    %36 = sfence
    %s37 = sld [smem:[#allocation2]]
    %s38 = sld [smem:[#allocation2 + $0x1]]
    %s39 = sld [smem:[#allocation2 + $0x2]]
    %v40 = vld [vmem:[#allocation6] sm:$0xff]
    %v41 = vld [vmem:[#allocation6 + $0x8] sm:$0xff]
    %v42 = vld [vmem:[#allocation6 + $0x10] sm:$0xff]
    %v43 = vld [vmem:[#allocation6 + $0x18] sm:$0xff]
    %v44 = vld [vmem:[#allocation6 + $0x20] sm:$0xff]
    %v45 = vld [vmem:[#allocation6 + $0x28] sm:$0xff]
    %v46 = vld [vmem:[#allocation6 + $0x30] sm:$0xff]
    %v47 = vld [vmem:[#allocation6 + $0x38] sm:$0xff]
    %v48 = vld [vmem:[#allocation6 + $0x40] sm:$0xff]
    %v49 = vld [vmem:[#allocation6 + $0x48] sm:$0xff]
    %v50 = vld [vmem:[#allocation6 + $0x50] sm:$0xff]
    %v51 = vld [vmem:[#allocation6 + $0x58] sm:$0xff]
    %v52 = vld [vmem:[#allocation6 + $0x60] sm:$0xff]
    %v53 = vld [vmem:[#allocation6 + $0x68] sm:$0xff]
    %v54 = vld [vmem:[#allocation6 + $0x70] sm:$0xff]
    %v55 = vld [vmem:[#allocation6 + $0x78] sm:$0xff]
    %v56 = vstv %s39
    %v57 = vadd.f32 %v40, %v56
    %v58 = vadd.f32 %v41, %v56
    %v59 = vadd.f32 %v42, %v56
    %v60 = vadd.f32 %v43, %v56
    %v61 = vadd.f32 %v44, %v56
    %v62 = vadd.f32 %v45, %v56
    %v63 = vadd.f32 %v46, %v56
    %v64 = vadd.f32 %v47, %v56
    %v65 = vadd.f32 %v48, %v56
    %v66 = vadd.f32 %v49, %v56
    %v67 = vadd.f32 %v50, %v56
    %v68 = vadd.f32 %v51, %v56
    %v69 = vadd.f32 %v52, %v56
    %v70 = vadd.f32 %v53, %v56
    %v71 = vadd.f32 %v54, %v56
    %v72 = vadd.f32 %v55, %v56
    %v73 = vstv %s38
    %v74 = vmul.f32 %v57, %v73
    %v75 = vmul.f32 %v58, %v73
    %v76 = vmul.f32 %v59, %v73
    %v77 = vmul.f32 %v60, %v73
    %v78 = vmul.f32 %v61, %v73
    %v79 = vmul.f32 %v62, %v73
    %v80 = vmul.f32 %v63, %v73
    %v81 = vmul.f32 %v64, %v73
    %v82 = vmul.f32 %v65, %v73
    %v83 = vmul.f32 %v66, %v73
    %v84 = vmul.f32 %v67, %v73
    %v85 = vmul.f32 %v68, %v73
    %v86 = vmul.f32 %v69, %v73
    %v87 = vmul.f32 %v70, %v73
    %v88 = vmul.f32 %v71, %v73
    %v89 = vmul.f32 %v72, %v73
    %v90 = vmax.f32 %v74, 0.0
    %v91 = vmax.f32 %v75, 0.0
    %v92 = vmax.f32 %v76, 0.0
    %v93 = vmax.f32 %v77, 0.0
    %v94 = vmax.f32 %v78, 0.0
    %v95 = vmax.f32 %v79, 0.0
    %v96 = vmax.f32 %v80, 0.0
    %v97 = vmax.f32 %v81, 0.0
    %v98 = vmax.f32 %v82, 0.0
    %v99 = vmax.f32 %v83, 0.0
    %v100 = vmax.f32 %v84, 0.0
    %v101 = vmax.f32 %v85, 0.0
    %v102 = vmax.f32 %v86, 0.0
    %v103 = vmax.f32 %v87, 0.0
    %v104 = vmax.f32 %v88, 0.0
    %v105 = vmax.f32 %v89, 0.0
    %v106 = vmin.f32 %v90, 255.0
    %v107 = vmin.f32 %v91, 255.0
    %v108 = vmin.f32 %v92, 255.0
    %v109 = vmin.f32 %v93, 255.0
    %v110 = vmin.f32 %v94, 255.0
    %v111 = vmin.f32 %v95, 255.0
    %v112 = vmin.f32 %v96, 255.0
    %v113 = vmin.f32 %v97, 255.0
    %v114 = vmin.f32 %v98, 255.0
    %v115 = vmin.f32 %v99, 255.0
    %v116 = vmin.f32 %v100, 255.0
    %v117 = vmin.f32 %v101, 255.0
    %v118 = vmin.f32 %v102, 255.0
    %v119 = vmin.f32 %v103, 255.0
    %v120 = vmin.f32 %v104, 255.0
    %v121 = vmin.f32 %v105, 255.0
    %v122 = vround.ne.pseudo %v106
    %v123 = vround.ne.pseudo %v107
    %v124 = vround.ne.pseudo %v108
    %v125 = vround.ne.pseudo %v109
    %v126 = vround.ne.pseudo %v110
    %v127 = vround.ne.pseudo %v111
    %v128 = vround.ne.pseudo %v112
    %v129 = vround.ne.pseudo %v113
    %v130 = vround.ne.pseudo %v114
    %v131 = vround.ne.pseudo %v115
    %v132 = vround.ne.pseudo %v116
    %v133 = vround.ne.pseudo %v117
    %v134 = vround.ne.pseudo %v118
    %v135 = vround.ne.pseudo %v119
    %v136 = vround.ne.pseudo %v120
    %v137 = vround.ne.pseudo %v121
    %v138 = vstv %s37
    %v139 = vmul.f32 %v122, %v138
    %v140 = vmul.f32 %v123, %v138
    %v141 = vmul.f32 %v124, %v138
    %v142 = vmul.f32 %v125, %v138
    %v143 = vmul.f32 %v126, %v138
    %v144 = vmul.f32 %v127, %v138
    %v145 = vmul.f32 %v128, %v138
    %v146 = vmul.f32 %v129, %v138
    %v147 = vmul.f32 %v130, %v138
    %v148 = vmul.f32 %v131, %v138
    %v149 = vmul.f32 %v132, %v138
    %v150 = vmul.f32 %v133, %v138
    %v151 = vmul.f32 %v134, %v138
    %v152 = vmul.f32 %v135, %v138
    %v153 = vmul.f32 %v136, %v138
    %v154 = vmul.f32 %v137, %v138
    %v155 = vsub.f32 %v139, %v56
    %v156 = vsub.f32 %v140, %v56
    %v157 = vsub.f32 %v141, %v56
    %v158 = vsub.f32 %v142, %v56
    %v159 = vsub.f32 %v143, %v56
    %v160 = vsub.f32 %v144, %v56
    %v161 = vsub.f32 %v145, %v56
    %v162 = vsub.f32 %v146, %v56
    %v163 = vsub.f32 %v147, %v56
    %v164 = vsub.f32 %v148, %v56
    %v165 = vsub.f32 %v149, %v56
    %v166 = vsub.f32 %v150, %v56
    %v167 = vsub.f32 %v151, %v56
    %v168 = vsub.f32 %v152, %v56
    %v169 = vsub.f32 %v153, %v56
    %v170 = vsub.f32 %v154, %v56
    %171 = vst [vmem:[#allocation7] sm:$0xff] %v155
    %172 = vst [vmem:[#allocation7 + $0x8] sm:$0xff] %v156
    %173 = vst [vmem:[#allocation7 + $0x10] sm:$0xff] %v157
    %174 = vst [vmem:[#allocation7 + $0x18] sm:$0xff] %v158
    %175 = vst [vmem:[#allocation7 + $0x20] sm:$0xff] %v159
    %176 = vst [vmem:[#allocation7 + $0x28] sm:$0xff] %v160
    %177 = vst [vmem:[#allocation7 + $0x30] sm:$0xff] %v161
    %178 = vst [vmem:[#allocation7 + $0x38] sm:$0xff] %v162
    %179 = vst [vmem:[#allocation7 + $0x40] sm:$0xff] %v163
    %180 = vst [vmem:[#allocation7 + $0x48] sm:$0xff] %v164
    %181 = vst [vmem:[#allocation7 + $0x50] sm:$0xff] %v165
    %182 = vst [vmem:[#allocation7 + $0x58] sm:$0xff] %v166
    %183 = vst [vmem:[#allocation7 + $0x60] sm:$0xff] %v167
    %184 = vst [vmem:[#allocation7 + $0x68] sm:$0xff] %v168
    %185 = vst [vmem:[#allocation7 + $0x70] sm:$0xff] %v169
    %186 = vst [vmem:[#allocation7 + $0x78] sm:$0xff] %v170
    // Predicated region
    $region18: #{tpu_custom_call.1} parent=1 // pred_check
      _
    $region19: #{tpu_custom_call.1} parent=1 // pred_check_branch
      %188 = sbr.rel (0) target = $region21
    $region20: #{tpu_custom_call.1} parent=1 // pred_region
      %s190 = ssub.s32 2048, 256
      %191 = vsyncadd [#allocation4], %s190
      %s192 = sshll.u32 [#allocation7], 4
      %s193 = int_to_ptr.vmem [resolvable:$true] %s192
      %198 = dma.vmem_to_hbm [thread:$0]  %s193, 256, %s2, [#allocation4], 256, 256, 16
    $region21: #{tpu_custom_call.1} parent=1 // pred_fallthru
      _
    // Predicated region
    $region22: #{tpu_custom_call.1} parent=1 // pred_check
      _
    $region23: #{tpu_custom_call.1} parent=1 // pred_check_branch
      %200 = sbr.rel (0) target = $region25
    $region24: #{tpu_custom_call.1} parent=1 // pred_region
      %201 = dma.done [#allocation4], 2048
    $region25: #{tpu_custom_call.1} parent=1 // pred_fallthru
      _
    %202 = vsyncpa [#allocation3], 1
    %203 = vsyncpa [#allocation4], 1
    %204 = vsyncpa [#allocation5], 1

</llo_original>
